<compile_context>
chip_gen: v6e
topology: v6e:2x2x1
jax: 0.10.0
libtpu: 0.0.40
codegen_flags: <defaults>
</compile_context>

<pallas_src>
import functools

import jax
import jax.numpy as jnp
from jax.experimental import pallas as pl
from jax.experimental.pallas import tpu as pltpu


# -----------------------------------------------------------------------------
# Fused kernel: embedding gather + n_layers SAGEConv('mean') layers
# -----------------------------------------------------------------------------
def _fused_sage_kernel(*refs, n_layers):
    """refs = (ids, embed, adj_0..adj_{L-1}, w_0, b_0, ..., w_{L-1}, b_{L-1},
               out, h_scratch)."""
    ids_ref, embed_ref = refs[0], refs[1]
    adj_refs = refs[2:2 + n_layers]
    wb_refs = refs[2 + n_layers:2 + 3 * n_layers]
    o_ref = refs[2 + 3 * n_layers]
    h_ref = refs[2 + 3 * n_layers + 1]            # VMEM scratch carrying h (f32)

    # ---- embedding gather, fused as an exact one-hot MXU matmul (bf16 in, f32 acc)
    ids = ids_ref[...]                                         # (S0p, 1) int32
    s0p = ids.shape[0]
    nodes_pad = embed_ref.shape[0]
    col = jax.lax.broadcasted_iota(jnp.int32, (s0p, nodes_pad), 1)
    onehot = (col == ids).astype(jnp.bfloat16)                 # exactly one 1 per row
    h_ref[...] = jnp.dot(onehot, embed_ref[...],
                         preferred_element_type=jnp.float32)   # (S0p, Fp) f32

    # ---- SAGEConv layers, unrolled at trace time ------------------------------
    for l in range(n_layers):
        adj = adj_refs[l][...]                                  # (Dp, Sp) bf16, 0/1
        dp, sp = adj.shape
        h_src = h_ref[:sp, :]                                   # sublane-aligned slice
        h_dst = h_ref[:dp, :]

        # mean aggregation: (A @ h_src) * 1/deg, deg clamped to >= 1 (DGL)
        deg = jnp.sum(adj.astype(jnp.float32), axis=1, keepdims=True)   # XLU reduce
        inv_deg = pl.reciprocal(jnp.maximum(deg, 1.0), approx=True)     # EUP
        h_neigh = jnp.dot(adj, h_src.astype(jnp.bfloat16),
                          preferred_element_type=jnp.float32) * inv_deg

        # single merged matmul: [h_dst || h_neigh] @ [W_self ; W_neigh] + bias
        h_cat = jnp.concatenate([h_dst, h_neigh], axis=1).astype(jnp.bfloat16)
        w = wb_refs[2 * l][...]                                 # (2*Fp, Fp) bf16
        b = wb_refs[2 * l + 1][...]                             # (1, Fp)   f32
        out = jnp.dot(h_cat, w, preferred_element_type=jnp.float32) + b

        if l != n_layers - 1:
            out = jnp.maximum(out, 0.0)        # ReLU; dropout = eval-mode identity
            h_ref[:dp, :] = out                # carry in VMEM, no HBM round trip
        else:
            o_ref[...] = out.astype(o_ref.dtype)


# -----------------------------------------------------------------------------
# Wrapper: padding to (8, 128) tiles + single pallas_call
# -----------------------------------------------------------------------------
def _round_up(x, m):
    return (x + m - 1) // m * m


def _pad2d(x, rows, cols):
    r, c = x.shape
    return jnp.pad(x, ((0, rows - r), (0, cols - c)))


def sage_forward(embed_table, input_nodes, blocks, params, *, fp=128):
    """Full SAGE.forward: embedding lookup + n_layers of SAGEConv, one kernel."""
    n_layers = len(params)
    assert len(blocks) == n_layers

    num_nodes, in_feats = embed_table.shape
    nodes_pad = _round_up(num_nodes, 128)

    n_src0 = input_nodes.shape[0]
    s0p = _round_up(n_src0, 8)

    d = [a.shape[0] for a in blocks]             # dst counts per layer
    s = [a.shape[1] for a in blocks]             # src counts per layer
    for l in range(n_layers):
        assert d[l] <= s[l], "DGL blocks: dst nodes must be a prefix of src nodes"
    dp = [_round_up(x, 8) for x in d]            # padded dst counts
    sp = [s0p] + dp[:-1]                         # padded src counts (chained)

    # --- pad inputs (zeros never contribute: zero adj cols/rows, zero W rows) ---
    ids_pad = jnp.pad(input_nodes.astype(jnp.int32).reshape(-1, 1),
                      ((0, s0p - n_src0), (0, 0)))
    embed_pad = _pad2d(embed_table.astype(jnp.float32),
                       nodes_pad, fp).astype(jnp.bfloat16)

    adj_pad, wb_pad = [], []
    for l in range(n_layers):
        adj_pad.append(_pad2d(blocks[l].astype(jnp.float32),
                              dp[l], sp[l]).astype(jnp.bfloat16))
        f_in, f_out = params[l]["w_self"].shape
        w = jnp.zeros((2 * fp, fp), jnp.float32)
        w = w.at[:f_in, :f_out].set(params[l]["w_self"])
        w = w.at[fp:fp + f_in, :f_out].set(params[l]["w_neigh"])
        b = jnp.zeros((1, fp), jnp.float32).at[:, :f_out].set(
            params[l]["bias"].reshape(1, -1))
        wb_pad += [w.astype(jnp.bfloat16), b]

    n_classes = params[-1]["w_self"].shape[1]
    inputs = [ids_pad, embed_pad, *adj_pad, *wb_pad]

    vmem = lambda: pl.BlockSpec(memory_space=pltpu.MemorySpace.VMEM)
    out_pad = pl.pallas_call(
        functools.partial(_fused_sage_kernel, n_layers=n_layers),
        out_shape=jax.ShapeDtypeStruct((dp[-1], fp), jnp.float32),
        in_specs=[vmem() for _ in inputs],
        out_specs=vmem(),
        scratch_shapes=[pltpu.VMEM((s0p, fp), jnp.float32)],   # carried h
    )(*inputs)

    return out_pad[:d[-1], :n_classes]


# -----------------------------------------------------------------------------
# Plain-JAX reference (exact f32 semantics of the PyTorch module, eval mode)
# -----------------------------------------------------------------------------
def sage_reference(embed_table, input_nodes, blocks, params):
    h = embed_table[input_nodes]
    for l, (adj, p) in enumerate(zip(blocks, params)):
        n_dst = adj.shape[0]
        h_dst = h[:n_dst]
        deg = jnp.maximum(jnp.sum(adj, axis=1, keepdims=True), 1.0)
        h_neigh = (adj @ h) / deg
        h = h_dst @ p["w_self"] + h_neigh @ p["w_neigh"] + p["bias"]
        if l != len(params) - 1:
            h = jax.nn.relu(h)
    return h


def make_params(key, dims):
    """Deterministic SAGEConv params: (W_self, W_neigh, bias) per layer."""
    params = []
    for (f_in, f_out) in dims:
        key, k1, k2 = jax.random.split(key, 3)
        scale = 1.0 / jnp.sqrt(jnp.float32(f_in))
        params.append({
            "w_self": jax.random.normal(k1, (f_in, f_out), jnp.float32) * scale,
            "w_neigh": jax.random.normal(k2, (f_in, f_out), jnp.float32) * scale,
            "bias": jnp.zeros((1, f_out), jnp.float32),
        })
    return params


if __name__ == "__main__":
    key = jax.random.PRNGKey(0)

    # Small synthetic config consistent with the module's __init__
    num_nodes, in_feats, n_hidden, n_classes, n_layers = 100, 32, 32, 8, 3
    n_src0, n_dst = 32, [16, 8, 4]          # src/dst node counts per block

    key, k_emb, k_ids = jax.random.split(key, 3)
    embed_table = jax.random.normal(k_emb, (num_nodes, in_feats), jnp.float32)
    input_nodes = jax.random.randint(k_ids, (n_src0,), 0, num_nodes, jnp.int32)

    # Bipartite blocks as dense adjacency [num_dst, num_src]; dst nodes of
    # block l are the first num_dst src nodes of block l (DGL convention).
    blocks = []
    src_counts = [n_src0] + n_dst[:-1]
    for l in range(n_layers):
        key, k_adj = jax.random.split(key)
        adj = (jax.random.uniform(k_adj, (n_dst[l], src_counts[l])) < 0.4)
        blocks.append(adj.astype(jnp.float32))

    layer_dims = [(in_feats, n_hidden)] + \
                 [(n_hidden, n_hidden)] * (n_layers - 2) + \
                 [(n_hidden, n_classes)]
    params = make_params(key, layer_dims)

    out = jax.jit(sage_forward)(embed_table, input_nodes, blocks, params)
    jax.block_until_ready(out)
    assert out.shape == (n_dst[-1], n_classes), out.shape

    ref = sage_reference(embed_table, input_nodes, blocks, params)
    max_err = float(jnp.max(jnp.abs(out - ref)))
    # bf16 MXU inputs + approx reciprocal => loose tolerance vs exact f32 reference
    assert jnp.allclose(out, ref, rtol=0.15, atol=0.15), f"max abs err {max_err}"
    print("KERNEL_OK")
</pallas_src>

<mosaic_0001>
module attributes {stable_mosaic.version = 11 : i64} {
  func.func @_fused_sage_kernel(%arg0: memref<32x1xi32, #tpu.memory_space<vmem>>, %arg1: memref<128x128xbf16, #tpu.memory_space<vmem>>, %arg2: memref<16x32xbf16, #tpu.memory_space<vmem>>, %arg3: memref<8x16xbf16, #tpu.memory_space<vmem>>, %arg4: memref<8x8xbf16, #tpu.memory_space<vmem>>, %arg5: memref<256x128xbf16, #tpu.memory_space<vmem>>, %arg6: memref<1x128xf32, #tpu.memory_space<vmem>>, %arg7: memref<256x128xbf16, #tpu.memory_space<vmem>>, %arg8: memref<1x128xf32, #tpu.memory_space<vmem>>, %arg9: memref<256x128xbf16, #tpu.memory_space<vmem>>, %arg10: memref<1x128xf32, #tpu.memory_space<vmem>>, %arg11: memref<8x128xf32, #tpu.memory_space<vmem>>, %arg12: memref<32x128xf32, #tpu.memory_space<vmem>>) attributes {dimension_semantics = [], scalar_prefetch = 0 : i64, scratch_operands = 1 : i64, tpu.core_type = #tpu.core_type<tc>} {
    %c0 = arith.constant 0 : index
    %c0_0 = arith.constant 0 : index
    %0 = vector.load %arg0[%c0, %c0_0] : memref<32x1xi32, #tpu.memory_space<vmem>>, vector<32x1xi32>
    %1 = tpu.iota {dimensions = array<i32: 1>} : vector<32x128xi32>
    %2 = vector.broadcast %0 : vector<32x1xi32> to vector<32x128xi32>
    %3 = arith.cmpi eq, %1, %2 : vector<32x128xi32>
    %4 = arith.extui %3 : vector<32x128xi1> to vector<32x128xi32>
    %5 = arith.sitofp %4 : vector<32x128xi32> to vector<32x128xf32>
    %6 = arith.truncf %5 : vector<32x128xf32> to vector<32x128xbf16>
    %c0_1 = arith.constant 0 : index
    %c0_2 = arith.constant 0 : index
    %7 = vector.load %arg1[%c0_1, %c0_2] : memref<128x128xbf16, #tpu.memory_space<vmem>>, vector<128x128xbf16>
    %cst = arith.constant dense<0.000000e+00> : vector<32x128xf32>
    %8 = tpu.matmul %6, %7, %cst {dimension_numbers = #tpu.dot_dimension_numbers<[1], [0], [0], [1], [0, 0, 1, 1], [], []>} : vector<32x128xbf16>, vector<128x128xbf16>, vector<32x128xf32> -> vector<32x128xf32>
    %c0_3 = arith.constant 0 : index
    %c0_4 = arith.constant 0 : index
    %9 = vector.load %arg12[%c0_3, %c0_4] : memref<32x128xf32, #tpu.memory_space<vmem>>, vector<32x128xf32>
    tpu.vector_store %arg12[%c0_3, %c0_4], %8 {strides = array<i32>} : memref<32x128xf32, #tpu.memory_space<vmem>>, vector<32x128xf32>,
    %c0_5 = arith.constant 0 : index
    %c0_6 = arith.constant 0 : index
    %10 = vector.load %arg2[%c0_5, %c0_6] : memref<16x32xbf16, #tpu.memory_space<vmem>>, vector<16x32xbf16>
    %c0_7 = arith.constant 0 : index
    %c0_8 = arith.constant 0 : index
    %11 = vector.load %arg12[%c0_7, %c0_8] : memref<32x128xf32, #tpu.memory_space<vmem>>, vector<32x128xf32>
    %c0_9 = arith.constant 0 : index
    %c0_10 = arith.constant 0 : index
    %12 = vector.load %arg12[%c0_9, %c0_10] : memref<32x128xf32, #tpu.memory_space<vmem>>, vector<16x128xf32>
    %13 = arith.extf %10 : vector<16x32xbf16> to vector<16x32xf32>
    %cst_11 = arith.constant dense<0.000000e+00> : vector<16xf32>
    %14 = vector.multi_reduction <add>, %13, %cst_11 [1] : vector<16x32xf32> to vector<16xf32>
    %15 = vector.shape_cast %14 : vector<16xf32> to vector<16x1xf32>
    %cst_12 = arith.constant 1.000000e+00 : f32
    %16 = vector.broadcast %cst_12 : f32 to vector<16x1xf32>
    %17 = arith.maximumf %15, %16 : vector<16x1xf32>
    %18 = tpu.reciprocal %17 {approx = true} : vector<16x1xf32> -> vector<16x1xf32>
    %19 = arith.truncf %11 : vector<32x128xf32> to vector<32x128xbf16>
    %cst_13 = arith.constant dense<0.000000e+00> : vector<16x128xf32>
    %20 = tpu.matmul %10, %19, %cst_13 {dimension_numbers = #tpu.dot_dimension_numbers<[1], [0], [0], [1], [0, 0, 1, 1], [], []>} : vector<16x32xbf16>, vector<32x128xbf16>, vector<16x128xf32> -> vector<16x128xf32>
    %21 = vector.broadcast %18 : vector<16x1xf32> to vector<16x128xf32>
    %22 = arith.mulf %20, %21 : vector<16x128xf32>
    %23 = tpu.concatenate %12, %22 in 1 : vector<16x128xf32>, vector<16x128xf32> -> vector<16x256xf32>
    %24 = arith.truncf %23 : vector<16x256xf32> to vector<16x256xbf16>
    %c0_14 = arith.constant 0 : index
    %c0_15 = arith.constant 0 : index
    %25 = vector.load %arg5[%c0_14, %c0_15] : memref<256x128xbf16, #tpu.memory_space<vmem>>, vector<256x128xbf16>
    %c0_16 = arith.constant 0 : index
    %c0_17 = arith.constant 0 : index
    %26 = vector.load %arg6[%c0_16, %c0_17] : memref<1x128xf32, #tpu.memory_space<vmem>>, vector<1x128xf32>
    %cst_18 = arith.constant dense<0.000000e+00> : vector<16x128xf32>
    %27 = tpu.matmul %24, %25, %cst_18 {dimension_numbers = #tpu.dot_dimension_numbers<[1], [0], [0], [1], [0, 0, 1, 1], [], []>} : vector<16x256xbf16>, vector<256x128xbf16>, vector<16x128xf32> -> vector<16x128xf32>
    %28 = vector.broadcast %26 : vector<1x128xf32> to vector<16x128xf32>
    %29 = arith.addf %27, %28 : vector<16x128xf32>
    %cst_19 = arith.constant 0.000000e+00 : f32
    %30 = vector.broadcast %cst_19 : f32 to vector<16x128xf32>
    %31 = arith.maximumf %29, %30 : vector<16x128xf32>
    %c0_20 = arith.constant 0 : index
    %c0_21 = arith.constant 0 : index
    %32 = vector.load %arg12[%c0_20, %c0_21] : memref<32x128xf32, #tpu.memory_space<vmem>>, vector<16x128xf32>
    tpu.vector_store %arg12[%c0_20, %c0_21], %31 {strides = array<i32>} : memref<32x128xf32, #tpu.memory_space<vmem>>, vector<16x128xf32>,
    %c0_22 = arith.constant 0 : index
    %c0_23 = arith.constant 0 : index
    %33 = vector.load %arg3[%c0_22, %c0_23] : memref<8x16xbf16, #tpu.memory_space<vmem>>, vector<8x16xbf16>
    %c0_24 = arith.constant 0 : index
    %c0_25 = arith.constant 0 : index
    %34 = vector.load %arg12[%c0_24, %c0_25] : memref<32x128xf32, #tpu.memory_space<vmem>>, vector<16x128xf32>
    %c0_26 = arith.constant 0 : index
    %c0_27 = arith.constant 0 : index
    %35 = vector.load %arg12[%c0_26, %c0_27] : memref<32x128xf32, #tpu.memory_space<vmem>>, vector<8x128xf32>
    %36 = arith.extf %33 : vector<8x16xbf16> to vector<8x16xf32>
    %cst_28 = arith.constant dense<0.000000e+00> : vector<8xf32>
    %37 = vector.multi_reduction <add>, %36, %cst_28 [1] : vector<8x16xf32> to vector<8xf32>
    %38 = vector.shape_cast %37 : vector<8xf32> to vector<8x1xf32>
    %cst_29 = arith.constant 1.000000e+00 : f32
    %39 = vector.broadcast %cst_29 : f32 to vector<8x1xf32>
    %40 = arith.maximumf %38, %39 : vector<8x1xf32>
    %41 = tpu.reciprocal %40 {approx = true} : vector<8x1xf32> -> vector<8x1xf32>
    %42 = arith.truncf %34 : vector<16x128xf32> to vector<16x128xbf16>
    %cst_30 = arith.constant dense<0.000000e+00> : vector<8x128xf32>
    %43 = tpu.matmul %33, %42, %cst_30 {dimension_numbers = #tpu.dot_dimension_numbers<[1], [0], [0], [1], [0, 0, 1, 1], [], []>} : vector<8x16xbf16>, vector<16x128xbf16>, vector<8x128xf32> -> vector<8x128xf32>
    %44 = vector.broadcast %41 : vector<8x1xf32> to vector<8x128xf32>
    %45 = arith.mulf %43, %44 : vector<8x128xf32>
    %46 = tpu.concatenate %35, %45 in 1 : vector<8x128xf32>, vector<8x128xf32> -> vector<8x256xf32>
    %47 = arith.truncf %46 : vector<8x256xf32> to vector<8x256xbf16>
    %c0_31 = arith.constant 0 : index
    %c0_32 = arith.constant 0 : index
    %48 = vector.load %arg7[%c0_31, %c0_32] : memref<256x128xbf16, #tpu.memory_space<vmem>>, vector<256x128xbf16>
    %c0_33 = arith.constant 0 : index
    %c0_34 = arith.constant 0 : index
    %49 = vector.load %arg8[%c0_33, %c0_34] : memref<1x128xf32, #tpu.memory_space<vmem>>, vector<1x128xf32>
    %cst_35 = arith.constant dense<0.000000e+00> : vector<8x128xf32>
    %50 = tpu.matmul %47, %48, %cst_35 {dimension_numbers = #tpu.dot_dimension_numbers<[1], [0], [0], [1], [0, 0, 1, 1], [], []>} : vector<8x256xbf16>, vector<256x128xbf16>, vector<8x128xf32> -> vector<8x128xf32>
    %51 = vector.broadcast %49 : vector<1x128xf32> to vector<8x128xf32>
    %52 = arith.addf %50, %51 : vector<8x128xf32>
    %cst_36 = arith.constant 0.000000e+00 : f32
    %53 = vector.broadcast %cst_36 : f32 to vector<8x128xf32>
    %54 = arith.maximumf %52, %53 : vector<8x128xf32>
    %c0_37 = arith.constant 0 : index
    %c0_38 = arith.constant 0 : index
    %55 = vector.load %arg12[%c0_37, %c0_38] : memref<32x128xf32, #tpu.memory_space<vmem>>, vector<8x128xf32>
    tpu.vector_store %arg12[%c0_37, %c0_38], %54 {strides = array<i32>} : memref<32x128xf32, #tpu.memory_space<vmem>>, vector<8x128xf32>,
    %c0_39 = arith.constant 0 : index
    %c0_40 = arith.constant 0 : index
    %56 = vector.load %arg4[%c0_39, %c0_40] : memref<8x8xbf16, #tpu.memory_space<vmem>>, vector<8x8xbf16>
    %c0_41 = arith.constant 0 : index
    %c0_42 = arith.constant 0 : index
    %57 = vector.load %arg12[%c0_41, %c0_42] : memref<32x128xf32, #tpu.memory_space<vmem>>, vector<8x128xf32>
    %c0_43 = arith.constant 0 : index
    %c0_44 = arith.constant 0 : index
    %58 = vector.load %arg12[%c0_43, %c0_44] : memref<32x128xf32, #tpu.memory_space<vmem>>, vector<8x128xf32>
    %59 = arith.extf %56 : vector<8x8xbf16> to vector<8x8xf32>
    %cst_45 = arith.constant dense<0.000000e+00> : vector<8xf32>
    %60 = vector.multi_reduction <add>, %59, %cst_45 [1] : vector<8x8xf32> to vector<8xf32>
    %61 = vector.shape_cast %60 : vector<8xf32> to vector<8x1xf32>
    %cst_46 = arith.constant 1.000000e+00 : f32
    %62 = vector.broadcast %cst_46 : f32 to vector<8x1xf32>
    %63 = arith.maximumf %61, %62 : vector<8x1xf32>
    %64 = tpu.reciprocal %63 {approx = true} : vector<8x1xf32> -> vector<8x1xf32>
    %65 = arith.truncf %57 : vector<8x128xf32> to vector<8x128xbf16>
    %cst_47 = arith.constant dense<0.000000e+00> : vector<8x128xf32>
    %66 = tpu.matmul %56, %65, %cst_47 {dimension_numbers = #tpu.dot_dimension_numbers<[1], [0], [0], [1], [0, 0, 1, 1], [], []>} : vector<8x8xbf16>, vector<8x128xbf16>, vector<8x128xf32> -> vector<8x128xf32>
    %67 = vector.broadcast %64 : vector<8x1xf32> to vector<8x128xf32>
    %68 = arith.mulf %66, %67 : vector<8x128xf32>
    %69 = tpu.concatenate %58, %68 in 1 : vector<8x128xf32>, vector<8x128xf32> -> vector<8x256xf32>
    %70 = arith.truncf %69 : vector<8x256xf32> to vector<8x256xbf16>
    %c0_48 = arith.constant 0 : index
    %c0_49 = arith.constant 0 : index
    %71 = vector.load %arg9[%c0_48, %c0_49] : memref<256x128xbf16, #tpu.memory_space<vmem>>, vector<256x128xbf16>
    %c0_50 = arith.constant 0 : index
    %c0_51 = arith.constant 0 : index
    %72 = vector.load %arg10[%c0_50, %c0_51] : memref<1x128xf32, #tpu.memory_space<vmem>>, vector<1x128xf32>
    %cst_52 = arith.constant dense<0.000000e+00> : vector<8x128xf32>
    %73 = tpu.matmul %70, %71, %cst_52 {dimension_numbers = #tpu.dot_dimension_numbers<[1], [0], [0], [1], [0, 0, 1, 1], [], []>} : vector<8x256xbf16>, vector<256x128xbf16>, vector<8x128xf32> -> vector<8x128xf32>
    %74 = vector.broadcast %72 : vector<1x128xf32> to vector<8x128xf32>
    %75 = arith.addf %73, %74 : vector<8x128xf32>
    %c0_53 = arith.constant 0 : index
    %c0_54 = arith.constant 0 : index
    %76 = vector.load %arg11[%c0_53, %c0_54] : memref<8x128xf32, #tpu.memory_space<vmem>>, vector<8x128xf32>
    tpu.vector_store %arg11[%c0_53, %c0_54], %75 {strides = array<i32>} : memref<8x128xf32, #tpu.memory_space<vmem>>, vector<8x128xf32>,
    return
  }
}

</mosaic_0001>

<llo_original>
// kernel: sage_forward.1
$region0: #{sage_forward.1}
  #allocation0 [shape = 'u32[]', space=smem, size = 0x4, offset = 0x4, fixed_abs, tag = 'smem constant byte address 0x4 - core index']
  #allocation1 [shape = 'u32[144,128]{1,0:T(1,128)}', space=vmem, size = 0x12000, scoped, tag = 'internal scratch']
  #allocation2 [shape = 'f32[32,128]{1,0:T(8,128)}', space=vmem, size = 0x4000, scoped, tag = 'scratch operand']
  %s0 = inlined_call_operand.vmem [shape: s32[32,1], index: 0, kind: input, shape index: {}]
  %s1 = inlined_call_operand.vmem [shape: bf16[128,128], index: 1, kind: input, shape index: {}]
  %s2 = inlined_call_operand.vmem [shape: bf16[16,32], index: 2, kind: input, shape index: {}]
  %s3 = inlined_call_operand.vmem [shape: bf16[8,16], index: 3, kind: input, shape index: {}]
  %s4 = inlined_call_operand.vmem [shape: bf16[8,8], index: 4, kind: input, shape index: {}]
  %s5 = inlined_call_operand.vmem [shape: bf16[256,128], index: 5, kind: input, shape index: {}]
  %s6 = inlined_call_operand.vmem [shape: f32[1,128], index: 6, kind: input, shape index: {}]
  %s7 = inlined_call_operand.vmem [shape: bf16[256,128], index: 7, kind: input, shape index: {}]
  %s8 = inlined_call_operand.vmem [shape: f32[1,128], index: 8, kind: input, shape index: {}]
  %s9 = inlined_call_operand.vmem [shape: bf16[256,128], index: 9, kind: input, shape index: {}]
  %s10 = inlined_call_operand.vmem [shape: f32[1,128], index: 10, kind: input, shape index: {}]
  %s11 = inlined_call_operand.vmem [shape: f32[8,128], index: 11, kind: output, shape index: {}]
  %s12 = sld [smem:[#allocation0]]
  $region54: #{sage_forward.1} parent=0
    _
  %s14 = ssub.s32 1, %s12
  %s15 = scalar_select 0, %s14, %s12
  // Predicated region
  $region2: #{sage_forward.1} parent=0 // pred_check
    _
  $region3: #{sage_forward.1} parent=0 // pred_check_branch
    %17 = sbr.rel (0) target = $region5
  $region4: #{sage_forward.1} parent=0 // pred_region
    _
  $region5: #{sage_forward.1} parent=0 // pred_fallthru
    _
  // Predicated region
  $region6: #{sage_forward.1} parent=0 // pred_check
    _
  $region7: #{sage_forward.1} parent=0 // pred_check_branch
    %19 = sbr.rel (0) target = $region9
  $region8: #{sage_forward.1} parent=0 // pred_region
    _
  $region9: #{sage_forward.1} parent=0 // pred_fallthru
    _
  // Predicated region
  $region10: #{sage_forward.1} parent=0 // pred_check
    _
  $region11: #{sage_forward.1} parent=0 // pred_check_branch
    %21 = sbr.rel (0) target = $region13
  $region12: #{sage_forward.1} parent=0 // pred_region
    _
  $region13: #{sage_forward.1} parent=0 // pred_fallthru
    _
  // Predicated region
  $region14: #{sage_forward.1} parent=0 // pred_check
    _
  $region15: #{sage_forward.1} parent=0 // pred_check_branch
    %23 = sbr.rel (0) target = $region17
  $region16: #{sage_forward.1} parent=0 // pred_region
    _
  $region17: #{sage_forward.1} parent=0 // pred_fallthru
    _
  // Predicated region
  $region18: #{sage_forward.1} parent=0 // pred_check
    _
  $region19: #{sage_forward.1} parent=0 // pred_check_branch
    %25 = sbr.rel (0) target = $region21
  $region20: #{sage_forward.1} parent=0 // pred_region
    _
  $region21: #{sage_forward.1} parent=0 // pred_fallthru
    _
  // Predicated region
  $region22: #{sage_forward.1} parent=0 // pred_check
    _
  $region23: #{sage_forward.1} parent=0 // pred_check_branch
    %27 = sbr.rel (0) target = $region25
  $region24: #{sage_forward.1} parent=0 // pred_region
    _
  $region25: #{sage_forward.1} parent=0 // pred_fallthru
    _
  // Predicated region
  $region26: #{sage_forward.1} parent=0 // pred_check
    _
  $region27: #{sage_forward.1} parent=0 // pred_check_branch
    %29 = sbr.rel (0) target = $region29
  $region28: #{sage_forward.1} parent=0 // pred_region
    _
  $region29: #{sage_forward.1} parent=0 // pred_fallthru
    _
  // Predicated region
  $region30: #{sage_forward.1} parent=0 // pred_check
    _
  $region31: #{sage_forward.1} parent=0 // pred_check_branch
    %31 = sbr.rel (0) target = $region33
  $region32: #{sage_forward.1} parent=0 // pred_region
    _
  $region33: #{sage_forward.1} parent=0 // pred_fallthru
    _
  // Predicated region
  $region34: #{sage_forward.1} parent=0 // pred_check
    _
  $region35: #{sage_forward.1} parent=0 // pred_check_branch
    %33 = sbr.rel (0) target = $region37
  $region36: #{sage_forward.1} parent=0 // pred_region
    _
  $region37: #{sage_forward.1} parent=0 // pred_fallthru
    _
  // Predicated region
  $region38: #{sage_forward.1} parent=0 // pred_check
    _
  $region39: #{sage_forward.1} parent=0 // pred_check_branch
    %35 = sbr.rel (0) target = $region41
  $region40: #{sage_forward.1} parent=0 // pred_region
    _
  $region41: #{sage_forward.1} parent=0 // pred_fallthru
    _
  // Predicated region
  $region42: #{sage_forward.1} parent=0 // pred_check
    _
  $region43: #{sage_forward.1} parent=0 // pred_check_branch
    %37 = sbr.rel (0) target = $region45
  $region44: #{sage_forward.1} parent=0 // pred_region
    _
  $region45: #{sage_forward.1} parent=0 // pred_fallthru
    _
  %v39 = vld [vmem:[%s0] sm:$0xff]
  %v40 = vld [vmem:[%s0 + $0x8] sm:$0xff]
  %v41 = vld [vmem:[%s0 + $0x10] sm:$0xff]
  %v42 = vld [vmem:[%s0 + $0x18] sm:$0xff]
  %v43 = vlaneseq
  %v44 = vand.u32 %v43, 127
  %45 = vset.pattern.permute.xlu0 0
  %46 = vperm.xlu0 %45, %v39
  %v47 = vpop.permute.xlu0 %46
  %48 = vset.pattern.permute.xlu0 0
  %49 = vperm.xlu0 %48, %v40
  %v50 = vpop.permute.xlu0 %49
  %51 = vset.pattern.permute.xlu0 0
  %52 = vperm.xlu0 %51, %v41
  %v53 = vpop.permute.xlu0 %52
  %54 = vset.pattern.permute.xlu0 0
  %55 = vperm.xlu0 %54, %v42
  %v56 = vpop.permute.xlu0 %55
  %vm57 = vcmp.eq.s32.totalorder %v44, %v47
  %vm58 = vcmp.eq.s32.totalorder %v44, %v50
  %vm59 = vcmp.eq.s32.totalorder %v44, %v53
  %vm60 = vcmp.eq.s32.totalorder %v44, %v56
  %v61 = vsel %vm57, 1, 0
  %v62 = vsel %vm58, 1, 0
  %v63 = vsel %vm59, 1, 0
  %v64 = vsel %vm60, 1, 0
  %v65 = vcvt.s32.f32 %v61
  %v66 = vcvt.s32.f32 %v62
  %v67 = vcvt.s32.f32 %v63
  %v68 = vcvt.s32.f32 %v64
  %v69 = vpack.c.bf16 %v66, %v65
  %v70 = vpack.c.bf16 %v68, %v67
  %v71 = vld [vmem:[%s1] sm:$0xf]
  %v72 = vld [vmem:[%s1 + $0x4] sm:$0xf]
  %v73 = vld [vmem:[%s1 + $0x8] sm:$0xf]
  %v74 = vld [vmem:[%s1 + $0xc] sm:$0xf]
  %v75 = vld [vmem:[%s1 + $0x10] sm:$0xf]
  %v76 = vld [vmem:[%s1 + $0x14] sm:$0xf]
  %v77 = vld [vmem:[%s1 + $0x18] sm:$0xf]
  %v78 = vld [vmem:[%s1 + $0x1c] sm:$0xf]
  %v79 = vld [vmem:[%s1 + $0x20] sm:$0xf]
  %v80 = vld [vmem:[%s1 + $0x24] sm:$0xf]
  %v81 = vld [vmem:[%s1 + $0x28] sm:$0xf]
  %v82 = vld [vmem:[%s1 + $0x2c] sm:$0xf]
  %v83 = vld [vmem:[%s1 + $0x30] sm:$0xf]
  %v84 = vld [vmem:[%s1 + $0x34] sm:$0xf]
  %v85 = vld [vmem:[%s1 + $0x38] sm:$0xf]
  %v86 = vld [vmem:[%s1 + $0x3c] sm:$0xf]
  %v103 = vunpack.c.l.b16 %v71
  %v104 = vunpack.c.l.b16 %v72
  %v105 = vunpack.c.l.b16 %v73
  %v106 = vunpack.c.l.b16 %v74
  %v107 = vunpack.c.l.b16 %v75
  %v108 = vunpack.c.l.b16 %v76
  %v109 = vunpack.c.l.b16 %v77
  %v110 = vunpack.c.l.b16 %v78
  %v111 = vunpack.c.l.b16 %v79
  %v112 = vunpack.c.l.b16 %v80
  %v113 = vunpack.c.l.b16 %v81
  %v114 = vunpack.c.l.b16 %v82
  %v115 = vunpack.c.l.b16 %v83
  %v116 = vunpack.c.l.b16 %v84
  %v117 = vunpack.c.l.b16 %v85
  %v118 = vunpack.c.l.b16 %v86
  %v119 = vpack.c.b16 %v104, %v103
  %v120 = vpack.c.b16 %v106, %v105
  %v121 = vpack.c.b16 %v108, %v107
  %v122 = vpack.c.b16 %v110, %v109
  %v123 = vpack.c.b16 %v112, %v111
  %v124 = vpack.c.b16 %v114, %v113
  %v125 = vpack.c.b16 %v116, %v115
  %v126 = vpack.c.b16 %v118, %v117
  %135 = vmatprep.subr.bf16.mxu0 0
  %136 = vmatpush1.bf16.msra.mxu0 %v126
  %137 = vmatprep.subr.bf16.mxu0 0
  %138 = vmatpush1.bf16.msra.mxu0 %v125
  %139 = vmatprep.subr.bf16.mxu0 0
  %140 = vmatpush1.bf16.msra.mxu0 %v124
  %141 = vmatprep.subr.bf16.mxu0 0
  %142 = vmatpush1.bf16.msra.mxu0 %v123
  %143 = vmatprep.subr.bf16.mxu0 0
  %144 = vmatpush1.bf16.msra.mxu0 %v122
  %145 = vmatprep.subr.bf16.mxu0 0
  %146 = vmatpush1.bf16.msra.mxu0 %v121
  %147 = vmatprep.subr.bf16.mxu0 0
  %148 = vmatpush1.bf16.msra.mxu0 %v120
  %149 = vmatprep.subr.bf16.mxu0 0
  %150 = vmatpush1.bf16.msra.mxu0 %v119
  %151 = vmatprep.subr.bf16.mxu0 0
  %152 = vmatpush2.bf16.msra.mxu0 0
  %153 = vmatprep.subr.bf16.mxu0 0
  %154 = vmatpush2.bf16.msra.mxu0 0
  %155 = vmatprep.subr.bf16.mxu0 0
  %156 = vmatpush2.bf16.msra.mxu0 0
  %157 = vmatprep.subr.bf16.mxu0 0
  %158 = vmatpush2.bf16.msra.mxu0 0
  %159 = vmatprep.subr.bf16.mxu0 0
  %160 = vmatpush2.bf16.msra.mxu0 0
  %161 = vmatprep.subr.bf16.mxu0 0
  %162 = vmatpush2.bf16.msra.mxu0 0
  %163 = vmatprep.subr.bf16.mxu0 0
  %164 = vmatpush2.bf16.msra.mxu0 0
  %165 = vmatprep.subr.bf16.mxu0 0
  %166 = vmatpush2.bf16.msra.mxu0 0
  %167 = vmatprep.mubr.bf16.mxu0 0
  %168 = vmatmul.mubr.bf16.gmra.mxu0 %v69
  %v169 = vpop.f32.mrf.mxu0
  %v170 = vadd.f32 0.0, %v169
  %v171 = vpop.f32.mrf.mxu0
  %v172 = vpop.f32.mrf.mxu0
  %v173 = vadd.f32 0.0, %v172
  %v174 = vpop.f32.mrf.mxu0
  %175 = vmatprep.mubr.bf16.mxu0 0
  %176 = vmatmul.mubr.bf16.gmra.mxu0 %v70
  %v177 = vpop.f32.mrf.mxu0
  %v178 = vadd.f32 0.0, %v177
  %v179 = vpop.f32.mrf.mxu0
  %v180 = vpop.f32.mrf.mxu0
  %v181 = vadd.f32 0.0, %v180
  %v182 = vpop.f32.mrf.mxu0
  %183 = vdwg.mxu0
  %184 = vst [vmem:[#allocation2] sm:$0xff] %v170
  %185 = vst [vmem:[#allocation2 + $0x8] sm:$0xff] %v173
  %186 = vst [vmem:[#allocation2 + $0x10] sm:$0xff] %v178
  %187 = vst [vmem:[#allocation2 + $0x18] sm:$0xff] %v181
  %v188 = vld [vmem:[%s2] sm:$0xf]
  %v189 = vld [vmem:[%s2 + $0x4] sm:$0xf]
  %v190 = vld [vmem:[#allocation2] sm:$0xff]
  %v191 = vld [vmem:[#allocation2 + $0x8] sm:$0xff]
  %v192 = vld [vmem:[#allocation2 + $0x10] sm:$0xff]
  %v193 = vld [vmem:[#allocation2 + $0x18] sm:$0xff]
  %v194 = vld [vmem:[#allocation2] sm:$0xff]
  %v195 = vld [vmem:[#allocation2 + $0x8] sm:$0xff]
  %v196 = vunpack.c.l.bf16 %v188
  %v197 = vunpack.c.l.bf16 %v189
  %vm198 = vcmask 261120
  %v199 = vsel %vm198, %v196, 0.0
  %200 = vadd.xlane.f32.xlu0 %v199
  %v201 = vpop.xlane.xlu0 %200
  %v202 = vsel %vm198, %v197, 0.0
  %203 = vadd.xlane.f32.xlu0 %v202
  %v204 = vpop.xlane.xlu0 %203
  %v205 = vmax.f32 %v201, 1.0
  %v206 = vmax.f32 %v204, 1.0
  %v207 = vrcp.pop %v205
  %v208 = vrcp.pop %v206
  %v209 = vpack.c.bf16 %v191, %v190
  %v210 = vpack.c.bf16 %v193, %v192
  %v213 = vunpack.c.l.b16 %v188
  %v214 = vunpack.c.l.b16 %v189
  %v215 = vpack.c.b16 %v214, %v213
  %v217 = vsel %vm198, %v215, 0
  %219 = vmatprep.subr.bf16.mxu0 0
  %220 = vmatpush1.bf16.msra.mxu0 0
  %221 = vmatprep.subr.bf16.mxu0 0
  %222 = vmatpush1.bf16.msra.mxu0 0
  %223 = vmatprep.subr.bf16.mxu0 0
  %224 = vmatpush1.bf16.msra.mxu0 0
  %225 = vmatprep.subr.bf16.mxu0 0
  %226 = vmatpush1.bf16.msra.mxu0 0
  %227 = vmatprep.subr.bf16.mxu0 0
  %228 = vmatpush1.bf16.msra.mxu0 0
  %229 = vmatprep.subr.bf16.mxu0 0
  %230 = vmatpush1.bf16.msra.mxu0 0
  %231 = vmatprep.subr.bf16.mxu0 0
  %232 = vmatpush1.bf16.msra.mxu0 %v210
  %233 = vmatprep.subr.bf16.mxu0 0
  %234 = vmatpush1.bf16.msra.mxu0 %v209
  %235 = vmatprep.subr.bf16.mxu0 0
  %236 = vmatpush2.bf16.msra.mxu0 0
  %237 = vmatprep.subr.bf16.mxu0 0
  %238 = vmatpush2.bf16.msra.mxu0 0
  %239 = vmatprep.subr.bf16.mxu0 0
  %240 = vmatpush2.bf16.msra.mxu0 0
  %241 = vmatprep.subr.bf16.mxu0 0
  %242 = vmatpush2.bf16.msra.mxu0 0
  %243 = vmatprep.subr.bf16.mxu0 0
  %244 = vmatpush2.bf16.msra.mxu0 0
  %245 = vmatprep.subr.bf16.mxu0 0
  %246 = vmatpush2.bf16.msra.mxu0 0
  %247 = vmatprep.subr.bf16.mxu0 0
  %248 = vmatpush2.bf16.msra.mxu0 0
  %249 = vmatprep.subr.bf16.mxu0 0
  %250 = vmatpush2.bf16.msra.mxu0 0
  %251 = vmatprep.mubr.bf16.mxu0 0
  %252 = vmatmul.mubr.bf16.gmra.mxu0 %v217
  %v253 = vpop.f32.mrf.mxu0
  %v254 = vadd.f32 0.0, %v253
  %v255 = vpop.f32.mrf.mxu0
  %v256 = vpop.f32.mrf.mxu0
  %v257 = vadd.f32 0.0, %v256
  %v258 = vpop.f32.mrf.mxu0
  %259 = vdwg.mxu0
  %v260 = vmul.f32 %v254, %v207
  %v261 = vmul.f32 %v257, %v208
  %v262 = vpack.c.bf16 %v195, %v194
  %v263 = vpack.c.bf16 %v261, %v260
  %v264 = vld [vmem:[%s5] sm:$0xf]
  %v265 = vld [vmem:[%s5 + $0x4] sm:$0xf]
  %v266 = vld [vmem:[%s5 + $0x8] sm:$0xf]
  %v267 = vld [vmem:[%s5 + $0xc] sm:$0xf]
  %v268 = vld [vmem:[%s5 + $0x10] sm:$0xf]
  %v269 = vld [vmem:[%s5 + $0x14] sm:$0xf]
  %v270 = vld [vmem:[%s5 + $0x18] sm:$0xf]
  %v271 = vld [vmem:[%s5 + $0x1c] sm:$0xf]
  %v272 = vld [vmem:[%s5 + $0x20] sm:$0xf]
  %v273 = vld [vmem:[%s5 + $0x24] sm:$0xf]
  %v274 = vld [vmem:[%s5 + $0x28] sm:$0xf]
  %v275 = vld [vmem:[%s5 + $0x2c] sm:$0xf]
  %v276 = vld [vmem:[%s5 + $0x30] sm:$0xf]
  %v277 = vld [vmem:[%s5 + $0x34] sm:$0xf]
  %v278 = vld [vmem:[%s5 + $0x38] sm:$0xf]
  %v279 = vld [vmem:[%s5 + $0x3c] sm:$0xf]
  %v280 = vld [vmem:[%s5 + $0x40] sm:$0xf]
  %v281 = vld [vmem:[%s5 + $0x44] sm:$0xf]
  %v282 = vld [vmem:[%s5 + $0x48] sm:$0xf]
  %v283 = vld [vmem:[%s5 + $0x4c] sm:$0xf]
  %v284 = vld [vmem:[%s5 + $0x50] sm:$0xf]
  %v285 = vld [vmem:[%s5 + $0x54] sm:$0xf]
  %v286 = vld [vmem:[%s5 + $0x58] sm:$0xf]
  %v287 = vld [vmem:[%s5 + $0x5c] sm:$0xf]
  %v288 = vld [vmem:[%s5 + $0x60] sm:$0xf]
  %v289 = vld [vmem:[%s5 + $0x64] sm:$0xf]
  %v290 = vld [vmem:[%s5 + $0x68] sm:$0xf]
  %v291 = vld [vmem:[%s5 + $0x6c] sm:$0xf]
  %v292 = vld [vmem:[%s5 + $0x70] sm:$0xf]
  %v293 = vld [vmem:[%s5 + $0x74] sm:$0xf]
  %v294 = vld [vmem:[%s5 + $0x78] sm:$0xf]
  %v295 = vld [vmem:[%s5 + $0x7c] sm:$0xf]
  %v296 = vld [vmem:[%s6] sm:$0x1]
  %v298 = vlaneseq
  %v299 = vshrl.u32 %v298, 7
  %v300 = vsub.s32 0, %v299
  %v301 = vrot.slane %v296, %v300
  %v335 = vunpack.c.l.b16 %v264
  %v336 = vunpack.c.l.b16 %v265
  %v337 = vunpack.c.l.b16 %v266
  %v338 = vunpack.c.l.b16 %v267
  %v339 = vunpack.c.l.b16 %v268
  %v340 = vunpack.c.l.b16 %v269
  %v341 = vunpack.c.l.b16 %v270
  %v342 = vunpack.c.l.b16 %v271
  %v343 = vunpack.c.l.b16 %v272
  %v344 = vunpack.c.l.b16 %v273
  %v345 = vunpack.c.l.b16 %v274
  %v346 = vunpack.c.l.b16 %v275
  %v347 = vunpack.c.l.b16 %v276
  %v348 = vunpack.c.l.b16 %v277
  %v349 = vunpack.c.l.b16 %v278
  %v350 = vunpack.c.l.b16 %v279
  %v351 = vunpack.c.l.b16 %v280
  %v352 = vunpack.c.l.b16 %v281
  %v353 = vunpack.c.l.b16 %v282
  %v354 = vunpack.c.l.b16 %v283
  %v355 = vunpack.c.l.b16 %v284
  %v356 = vunpack.c.l.b16 %v285
  %v357 = vunpack.c.l.b16 %v286
  %v358 = vunpack.c.l.b16 %v287
  %v359 = vunpack.c.l.b16 %v288
  %v360 = vunpack.c.l.b16 %v289
  %v361 = vunpack.c.l.b16 %v290
  %v362 = vunpack.c.l.b16 %v291
  %v363 = vunpack.c.l.b16 %v292
  %v364 = vunpack.c.l.b16 %v293
  %v365 = vunpack.c.l.b16 %v294
  %v366 = vunpack.c.l.b16 %v295
  %v367 = vpack.c.b16 %v336, %v335
  %v368 = vpack.c.b16 %v338, %v337
  %v369 = vpack.c.b16 %v340, %v339
  %v370 = vpack.c.b16 %v342, %v341
  %v371 = vpack.c.b16 %v344, %v343
  %v372 = vpack.c.b16 %v346, %v345
  %v373 = vpack.c.b16 %v348, %v347
  %v374 = vpack.c.b16 %v350, %v349
  %v375 = vpack.c.b16 %v352, %v351
  %v376 = vpack.c.b16 %v354, %v353
  %v377 = vpack.c.b16 %v356, %v355
  %v378 = vpack.c.b16 %v358, %v357
  %v379 = vpack.c.b16 %v360, %v359
  %v380 = vpack.c.b16 %v362, %v361
  %v381 = vpack.c.b16 %v364, %v363
  %v382 = vpack.c.b16 %v366, %v365
  %399 = vmatprep.subr.bf16.mxu0 0
  %400 = vmatpush1.bf16.msra.mxu0 %v374
  %401 = vmatprep.subr.bf16.mxu0 0
  %402 = vmatpush1.bf16.msra.mxu0 %v373
  %403 = vmatprep.subr.bf16.mxu0 0
  %404 = vmatpush1.bf16.msra.mxu0 %v372
  %405 = vmatprep.subr.bf16.mxu0 0
  %406 = vmatpush1.bf16.msra.mxu0 %v371
  %407 = vmatprep.subr.bf16.mxu0 0
  %408 = vmatpush1.bf16.msra.mxu0 %v370
  %409 = vmatprep.subr.bf16.mxu0 0
  %410 = vmatpush1.bf16.msra.mxu0 %v369
  %411 = vmatprep.subr.bf16.mxu0 0
  %412 = vmatpush1.bf16.msra.mxu0 %v368
  %413 = vmatprep.subr.bf16.mxu0 0
  %414 = vmatpush1.bf16.msra.mxu0 %v367
  %415 = vmatprep.subr.bf16.mxu0 0
  %416 = vmatpush2.bf16.msra.mxu0 %v382
  %417 = vmatprep.subr.bf16.mxu0 0
  %418 = vmatpush2.bf16.msra.mxu0 %v381
  %419 = vmatprep.subr.bf16.mxu0 0
  %420 = vmatpush2.bf16.msra.mxu0 %v380
  %421 = vmatprep.subr.bf16.mxu0 0
  %422 = vmatpush2.bf16.msra.mxu0 %v379
  %423 = vmatprep.subr.bf16.mxu0 0
  %424 = vmatpush2.bf16.msra.mxu0 %v378
  %425 = vmatprep.subr.bf16.mxu0 0
  %426 = vmatpush2.bf16.msra.mxu0 %v377
  %427 = vmatprep.subr.bf16.mxu0 0
  %428 = vmatpush2.bf16.msra.mxu0 %v376
  %429 = vmatprep.subr.bf16.mxu0 0
  %430 = vmatpush2.bf16.msra.mxu0 %v375
  %431 = vmatprep.mubr.bf16.mxu0 %v263
  %432 = vmatmul.mubr.bf16.gmra.mxu0 %v262
  %v433 = vpop.f32.mrf.mxu0
  %v434 = vadd.f32 %v301, %v433
  %v435 = vpop.f32.mrf.mxu0
  %v436 = vpop.f32.mrf.mxu0
  %v437 = vadd.f32 %v301, %v436
  %v438 = vpop.f32.mrf.mxu0
  %439 = vdwg.mxu0
  %v440 = vmax.f32 %v434, 0.0
  %v441 = vmax.f32 %v437, 0.0
  %442 = vst [vmem:[#allocation2] sm:$0xff] %v440
  %443 = vst [vmem:[#allocation2 + $0x8] sm:$0xff] %v441
  %v444 = vld [vmem:[%s3] sm:$0xf]
  %v445 = vld [vmem:[#allocation2] sm:$0xff]
  %v446 = vld [vmem:[#allocation2 + $0x8] sm:$0xff]
  %v447 = vunpack.c.l.bf16 %v444
  %vm448 = vcmask 130048
  %v449 = vsel %vm448, %v447, 0.0
  %450 = vadd.xlane.f32.xlu0 %v449
  %v451 = vpop.xlane.xlu0 %450
  %v452 = vmax.f32 %v451, 1.0
  %v453 = vrcp.pop %v452
  %v454 = vpack.c.bf16 %v446, %v445
  %v456 = vsel %vm448, %v444, 0
  %458 = vmatprep.subr.bf16.mxu0 0
  %459 = vmatpush1.bf16.msra.mxu0 0
  %460 = vmatprep.subr.bf16.mxu0 0
  %461 = vmatpush1.bf16.msra.mxu0 0
  %462 = vmatprep.subr.bf16.mxu0 0
  %463 = vmatpush1.bf16.msra.mxu0 0
  %464 = vmatprep.subr.bf16.mxu0 0
  %465 = vmatpush1.bf16.msra.mxu0 0
  %466 = vmatprep.subr.bf16.mxu0 0
  %467 = vmatpush1.bf16.msra.mxu0 0
  %468 = vmatprep.subr.bf16.mxu0 0
  %469 = vmatpush1.bf16.msra.mxu0 0
  %470 = vmatprep.subr.bf16.mxu0 0
  %471 = vmatpush1.bf16.msra.mxu0 0
  %472 = vmatprep.subr.bf16.mxu0 0
  %473 = vmatpush1.bf16.msra.mxu0 %v454
  %474 = vmatprep.subr.bf16.mxu0 0
  %475 = vmatpush2.bf16.msra.mxu0 0
  %476 = vmatprep.subr.bf16.mxu0 0
  %477 = vmatpush2.bf16.msra.mxu0 0
  %478 = vmatprep.subr.bf16.mxu0 0
  %479 = vmatpush2.bf16.msra.mxu0 0
  %480 = vmatprep.subr.bf16.mxu0 0
  %481 = vmatpush2.bf16.msra.mxu0 0
  %482 = vmatprep.subr.bf16.mxu0 0
  %483 = vmatpush2.bf16.msra.mxu0 0
  %484 = vmatprep.subr.bf16.mxu0 0
  %485 = vmatpush2.bf16.msra.mxu0 0
  %486 = vmatprep.subr.bf16.mxu0 0
  %487 = vmatpush2.bf16.msra.mxu0 0
  %488 = vmatprep.subr.bf16.mxu0 0
  %489 = vmatpush2.bf16.msra.mxu0 0
  %490 = vmatprep.mubr.bf16.mxu0 0
  %491 = vmatmul.mubr.bf16.gmra.mxu0 %v456
  %v492 = vpop.f32.mrf.mxu0
  %v493 = vadd.f32 0.0, %v492
  %v494 = vpop.f32.mrf.mxu0
  %v495 = vpop.f32.mrf.mxu0
  %v496 = vpop.f32.mrf.mxu0
  %497 = vdwg.mxu0
  %v498 = vmul.f32 %v493, %v453
  %v499 = vpack.c.bf16 %v445, %v445
  %v500 = vpack.c.bf16 %v498, %v498
  %v501 = vld [vmem:[%s7] sm:$0xf]
  %v502 = vld [vmem:[%s7 + $0x4] sm:$0xf]
  %v503 = vld [vmem:[%s7 + $0x8] sm:$0xf]
  %v504 = vld [vmem:[%s7 + $0xc] sm:$0xf]
  %v505 = vld [vmem:[%s7 + $0x10] sm:$0xf]
  %v506 = vld [vmem:[%s7 + $0x14] sm:$0xf]
  %v507 = vld [vmem:[%s7 + $0x18] sm:$0xf]
  %v508 = vld [vmem:[%s7 + $0x1c] sm:$0xf]
  %v509 = vld [vmem:[%s7 + $0x20] sm:$0xf]
  %v510 = vld [vmem:[%s7 + $0x24] sm:$0xf]
  %v511 = vld [vmem:[%s7 + $0x28] sm:$0xf]
  %v512 = vld [vmem:[%s7 + $0x2c] sm:$0xf]
  %v513 = vld [vmem:[%s7 + $0x30] sm:$0xf]
  %v514 = vld [vmem:[%s7 + $0x34] sm:$0xf]
  %v515 = vld [vmem:[%s7 + $0x38] sm:$0xf]
  %v516 = vld [vmem:[%s7 + $0x3c] sm:$0xf]
  %v517 = vld [vmem:[%s7 + $0x40] sm:$0xf]
  %v518 = vld [vmem:[%s7 + $0x44] sm:$0xf]
  %v519 = vld [vmem:[%s7 + $0x48] sm:$0xf]
  %v520 = vld [vmem:[%s7 + $0x4c] sm:$0xf]
  %v521 = vld [vmem:[%s7 + $0x50] sm:$0xf]
  %v522 = vld [vmem:[%s7 + $0x54] sm:$0xf]
  %v523 = vld [vmem:[%s7 + $0x58] sm:$0xf]
  %v524 = vld [vmem:[%s7 + $0x5c] sm:$0xf]
  %v525 = vld [vmem:[%s7 + $0x60] sm:$0xf]
  %v526 = vld [vmem:[%s7 + $0x64] sm:$0xf]
  %v527 = vld [vmem:[%s7 + $0x68] sm:$0xf]
  %v528 = vld [vmem:[%s7 + $0x6c] sm:$0xf]
  %v529 = vld [vmem:[%s7 + $0x70] sm:$0xf]
  %v530 = vld [vmem:[%s7 + $0x74] sm:$0xf]
  %v531 = vld [vmem:[%s7 + $0x78] sm:$0xf]
  %v532 = vld [vmem:[%s7 + $0x7c] sm:$0xf]
  %v533 = vld [vmem:[%s8] sm:$0x1]
  %v535 = vlaneseq
  %v536 = vshrl.u32 %v535, 7
  %v537 = vsub.s32 0, %v536
  %v538 = vrot.slane %v533, %v537
  %v572 = vunpack.c.l.b16 %v501
  %v573 = vunpack.c.l.b16 %v502
  %v574 = vunpack.c.l.b16 %v503
  %v575 = vunpack.c.l.b16 %v504
  %v576 = vunpack.c.l.b16 %v505
  %v577 = vunpack.c.l.b16 %v506
  %v578 = vunpack.c.l.b16 %v507
  %v579 = vunpack.c.l.b16 %v508
  %v580 = vunpack.c.l.b16 %v509
  %v581 = vunpack.c.l.b16 %v510
  %v582 = vunpack.c.l.b16 %v511
  %v583 = vunpack.c.l.b16 %v512
  %v584 = vunpack.c.l.b16 %v513
  %v585 = vunpack.c.l.b16 %v514
  %v586 = vunpack.c.l.b16 %v515
  %v587 = vunpack.c.l.b16 %v516
  %v588 = vunpack.c.l.b16 %v517
  %v589 = vunpack.c.l.b16 %v518
  %v590 = vunpack.c.l.b16 %v519
  %v591 = vunpack.c.l.b16 %v520
  %v592 = vunpack.c.l.b16 %v521
  %v593 = vunpack.c.l.b16 %v522
  %v594 = vunpack.c.l.b16 %v523
  %v595 = vunpack.c.l.b16 %v524
  %v596 = vunpack.c.l.b16 %v525
  %v597 = vunpack.c.l.b16 %v526
  %v598 = vunpack.c.l.b16 %v527
  %v599 = vunpack.c.l.b16 %v528
  %v600 = vunpack.c.l.b16 %v529
  %v601 = vunpack.c.l.b16 %v530
  %v602 = vunpack.c.l.b16 %v531
  %v603 = vunpack.c.l.b16 %v532
  %v604 = vpack.c.b16 %v573, %v572
  %v605 = vpack.c.b16 %v575, %v574
  %v606 = vpack.c.b16 %v577, %v576
  %v607 = vpack.c.b16 %v579, %v578
  %v608 = vpack.c.b16 %v581, %v580
  %v609 = vpack.c.b16 %v583, %v582
  %v610 = vpack.c.b16 %v585, %v584
  %v611 = vpack.c.b16 %v587, %v586
  %v612 = vpack.c.b16 %v589, %v588
  %v613 = vpack.c.b16 %v591, %v590
  %v614 = vpack.c.b16 %v593, %v592
  %v615 = vpack.c.b16 %v595, %v594
  %v616 = vpack.c.b16 %v597, %v596
  %v617 = vpack.c.b16 %v599, %v598
  %v618 = vpack.c.b16 %v601, %v600
  %v619 = vpack.c.b16 %v603, %v602
  %636 = vmatprep.subr.bf16.mxu0 0
  %637 = vmatpush1.bf16.msra.mxu0 %v611
  %638 = vmatprep.subr.bf16.mxu0 0
  %639 = vmatpush1.bf16.msra.mxu0 %v610
  %640 = vmatprep.subr.bf16.mxu0 0
  %641 = vmatpush1.bf16.msra.mxu0 %v609
  %642 = vmatprep.subr.bf16.mxu0 0
  %643 = vmatpush1.bf16.msra.mxu0 %v608
  %644 = vmatprep.subr.bf16.mxu0 0
  %645 = vmatpush1.bf16.msra.mxu0 %v607
  %646 = vmatprep.subr.bf16.mxu0 0
  %647 = vmatpush1.bf16.msra.mxu0 %v606
  %648 = vmatprep.subr.bf16.mxu0 0
  %649 = vmatpush1.bf16.msra.mxu0 %v605
  %650 = vmatprep.subr.bf16.mxu0 0
  %651 = vmatpush1.bf16.msra.mxu0 %v604
  %652 = vmatprep.subr.bf16.mxu0 0
  %653 = vmatpush2.bf16.msra.mxu0 %v619
  %654 = vmatprep.subr.bf16.mxu0 0
  %655 = vmatpush2.bf16.msra.mxu0 %v618
  %656 = vmatprep.subr.bf16.mxu0 0
  %657 = vmatpush2.bf16.msra.mxu0 %v617
  %658 = vmatprep.subr.bf16.mxu0 0
  %659 = vmatpush2.bf16.msra.mxu0 %v616
  %660 = vmatprep.subr.bf16.mxu0 0
  %661 = vmatpush2.bf16.msra.mxu0 %v615
  %662 = vmatprep.subr.bf16.mxu0 0
  %663 = vmatpush2.bf16.msra.mxu0 %v614
  %664 = vmatprep.subr.bf16.mxu0 0
  %665 = vmatpush2.bf16.msra.mxu0 %v613
  %666 = vmatprep.subr.bf16.mxu0 0
  %667 = vmatpush2.bf16.msra.mxu0 %v612
  %668 = vmatprep.mubr.bf16.mxu0 %v500
  %669 = vmatmul.mubr.bf16.gmra.mxu0 %v499
  %v670 = vpop.f32.mrf.mxu0
  %v671 = vadd.f32 %v538, %v670
  %v672 = vpop.f32.mrf.mxu0
  %v673 = vpop.f32.mrf.mxu0
  %v674 = vpop.f32.mrf.mxu0
  %675 = vdwg.mxu0
  %v676 = vmax.f32 %v671, 0.0
  %677 = vst [vmem:[#allocation2] sm:$0xff] %v676
  %v678 = vld [vmem:[%s4] sm:$0xf]
  %v679 = vld [vmem:[#allocation2] sm:$0xff]
  %v680 = vunpack.c.l.bf16 %v678
  %vm681 = vcmask 64512
  %v682 = vsel %vm681, %v680, 0.0
  %683 = vadd.xlane.f32.xlu0 %v682
  %v684 = vpop.xlane.xlu0 %683
  %v685 = vmax.f32 %v684, 1.0
  %v686 = vrcp.pop %v685
  %v687 = vpack.c.bf16 %v679, %v679
  %v689 = vsel %vm681, %v678, 0
  %vm691 = vcmask 1043456
  %v693 = vsel %vm691, %v687, 0
  %695 = vmatprep.subr.bf16.mxu0 0
  %696 = vmatpush1.bf16.msra.mxu0 0
  %697 = vmatprep.subr.bf16.mxu0 0
  %698 = vmatpush1.bf16.msra.mxu0 0
  %699 = vmatprep.subr.bf16.mxu0 0
  %700 = vmatpush1.bf16.msra.mxu0 0
  %701 = vmatprep.subr.bf16.mxu0 0
  %702 = vmatpush1.bf16.msra.mxu0 0
  %703 = vmatprep.subr.bf16.mxu0 0
  %704 = vmatpush1.bf16.msra.mxu0 0
  %705 = vmatprep.subr.bf16.mxu0 0
  %706 = vmatpush1.bf16.msra.mxu0 0
  %707 = vmatprep.subr.bf16.mxu0 0
  %708 = vmatpush1.bf16.msra.mxu0 0
  %709 = vmatprep.subr.bf16.mxu0 0
  %710 = vmatpush1.bf16.msra.mxu0 %v693
  %711 = vmatprep.subr.bf16.mxu0 0
  %712 = vmatpush2.bf16.msra.mxu0 0
  %713 = vmatprep.subr.bf16.mxu0 0
  %714 = vmatpush2.bf16.msra.mxu0 0
  %715 = vmatprep.subr.bf16.mxu0 0
  %716 = vmatpush2.bf16.msra.mxu0 0
  %717 = vmatprep.subr.bf16.mxu0 0
  %718 = vmatpush2.bf16.msra.mxu0 0
  %719 = vmatprep.subr.bf16.mxu0 0
  %720 = vmatpush2.bf16.msra.mxu0 0
  %721 = vmatprep.subr.bf16.mxu0 0
  %722 = vmatpush2.bf16.msra.mxu0 0
  %723 = vmatprep.subr.bf16.mxu0 0
  %724 = vmatpush2.bf16.msra.mxu0 0
  %725 = vmatprep.subr.bf16.mxu0 0
  %726 = vmatpush2.bf16.msra.mxu0 0
  %727 = vmatprep.mubr.bf16.mxu0 0
  %728 = vmatmul.mubr.bf16.gmra.mxu0 %v689
  %v729 = vpop.f32.mrf.mxu0
  %v730 = vadd.f32 0.0, %v729
  %v731 = vpop.f32.mrf.mxu0
  %v732 = vpop.f32.mrf.mxu0
  %v733 = vpop.f32.mrf.mxu0
  %734 = vdwg.mxu0
  %v735 = vmul.f32 %v730, %v686
  %v736 = vpack.c.bf16 %v735, %v735
  %v737 = vld [vmem:[%s9] sm:$0xf]
  %v738 = vld [vmem:[%s9 + $0x4] sm:$0xf]
  %v739 = vld [vmem:[%s9 + $0x8] sm:$0xf]
  %v740 = vld [vmem:[%s9 + $0xc] sm:$0xf]
  %v741 = vld [vmem:[%s9 + $0x10] sm:$0xf]
  %v742 = vld [vmem:[%s9 + $0x14] sm:$0xf]
  %v743 = vld [vmem:[%s9 + $0x18] sm:$0xf]
  %v744 = vld [vmem:[%s9 + $0x1c] sm:$0xf]
  %v745 = vld [vmem:[%s9 + $0x20] sm:$0xf]
  %v746 = vld [vmem:[%s9 + $0x24] sm:$0xf]
  %v747 = vld [vmem:[%s9 + $0x28] sm:$0xf]
  %v748 = vld [vmem:[%s9 + $0x2c] sm:$0xf]
  %v749 = vld [vmem:[%s9 + $0x30] sm:$0xf]
  %v750 = vld [vmem:[%s9 + $0x34] sm:$0xf]
  %v751 = vld [vmem:[%s9 + $0x38] sm:$0xf]
  %v752 = vld [vmem:[%s9 + $0x3c] sm:$0xf]
  %v753 = vld [vmem:[%s9 + $0x40] sm:$0xf]
  %v754 = vld [vmem:[%s9 + $0x44] sm:$0xf]
  %v755 = vld [vmem:[%s9 + $0x48] sm:$0xf]
  %v756 = vld [vmem:[%s9 + $0x4c] sm:$0xf]
  %v757 = vld [vmem:[%s9 + $0x50] sm:$0xf]
  %v758 = vld [vmem:[%s9 + $0x54] sm:$0xf]
  %v759 = vld [vmem:[%s9 + $0x58] sm:$0xf]
  %v760 = vld [vmem:[%s9 + $0x5c] sm:$0xf]
  %v761 = vld [vmem:[%s9 + $0x60] sm:$0xf]
  %v762 = vld [vmem:[%s9 + $0x64] sm:$0xf]
  %v763 = vld [vmem:[%s9 + $0x68] sm:$0xf]
  %v764 = vld [vmem:[%s9 + $0x6c] sm:$0xf]
  %v765 = vld [vmem:[%s9 + $0x70] sm:$0xf]
  %v766 = vld [vmem:[%s9 + $0x74] sm:$0xf]
  %v767 = vld [vmem:[%s9 + $0x78] sm:$0xf]
  %v768 = vld [vmem:[%s9 + $0x7c] sm:$0xf]
  %v769 = vld [vmem:[%s10] sm:$0x1]
  %v771 = vlaneseq
  %v772 = vshrl.u32 %v771, 7
  %v773 = vsub.s32 0, %v772
  %v774 = vrot.slane %v769, %v773
  %v808 = vunpack.c.l.b16 %v737
  %v809 = vunpack.c.l.b16 %v738
  %v810 = vunpack.c.l.b16 %v739
  %v811 = vunpack.c.l.b16 %v740
  %v812 = vunpack.c.l.b16 %v741
  %v813 = vunpack.c.l.b16 %v742
  %v814 = vunpack.c.l.b16 %v743
  %v815 = vunpack.c.l.b16 %v744
  %v816 = vunpack.c.l.b16 %v745
  %v817 = vunpack.c.l.b16 %v746
  %v818 = vunpack.c.l.b16 %v747
  %v819 = vunpack.c.l.b16 %v748
  %v820 = vunpack.c.l.b16 %v749
  %v821 = vunpack.c.l.b16 %v750
  %v822 = vunpack.c.l.b16 %v751
  %v823 = vunpack.c.l.b16 %v752
  %v824 = vunpack.c.l.b16 %v753
  %v825 = vunpack.c.l.b16 %v754
  %v826 = vunpack.c.l.b16 %v755
  %v827 = vunpack.c.l.b16 %v756
  %v828 = vunpack.c.l.b16 %v757
  %v829 = vunpack.c.l.b16 %v758
  %v830 = vunpack.c.l.b16 %v759
  %v831 = vunpack.c.l.b16 %v760
  %v832 = vunpack.c.l.b16 %v761
  %v833 = vunpack.c.l.b16 %v762
  %v834 = vunpack.c.l.b16 %v763
  %v835 = vunpack.c.l.b16 %v764
  %v836 = vunpack.c.l.b16 %v765
  %v837 = vunpack.c.l.b16 %v766
  %v838 = vunpack.c.l.b16 %v767
  %v839 = vunpack.c.l.b16 %v768
  %v840 = vpack.c.b16 %v809, %v808
  %v841 = vpack.c.b16 %v811, %v810
  %v842 = vpack.c.b16 %v813, %v812
  %v843 = vpack.c.b16 %v815, %v814
  %v844 = vpack.c.b16 %v817, %v816
  %v845 = vpack.c.b16 %v819, %v818
  %v846 = vpack.c.b16 %v821, %v820
  %v847 = vpack.c.b16 %v823, %v822
  %v848 = vpack.c.b16 %v825, %v824
  %v849 = vpack.c.b16 %v827, %v826
  %v850 = vpack.c.b16 %v829, %v828
  %v851 = vpack.c.b16 %v831, %v830
  %v852 = vpack.c.b16 %v833, %v832
  %v853 = vpack.c.b16 %v835, %v834
  %v854 = vpack.c.b16 %v837, %v836
  %v855 = vpack.c.b16 %v839, %v838
  %872 = vmatprep.subr.bf16.mxu0 0
  %873 = vmatpush1.bf16.msra.mxu0 %v847
  %874 = vmatprep.subr.bf16.mxu0 0
  %875 = vmatpush1.bf16.msra.mxu0 %v846
  %876 = vmatprep.subr.bf16.mxu0 0
  %877 = vmatpush1.bf16.msra.mxu0 %v845
  %878 = vmatprep.subr.bf16.mxu0 0
  %879 = vmatpush1.bf16.msra.mxu0 %v844
  %880 = vmatprep.subr.bf16.mxu0 0
  %881 = vmatpush1.bf16.msra.mxu0 %v843
  %882 = vmatprep.subr.bf16.mxu0 0
  %883 = vmatpush1.bf16.msra.mxu0 %v842
  %884 = vmatprep.subr.bf16.mxu0 0
  %885 = vmatpush1.bf16.msra.mxu0 %v841
  %886 = vmatprep.subr.bf16.mxu0 0
  %887 = vmatpush1.bf16.msra.mxu0 %v840
  %888 = vmatprep.subr.bf16.mxu0 0
  %889 = vmatpush2.bf16.msra.mxu0 %v855
  %890 = vmatprep.subr.bf16.mxu0 0
  %891 = vmatpush2.bf16.msra.mxu0 %v854
  %892 = vmatprep.subr.bf16.mxu0 0
  %893 = vmatpush2.bf16.msra.mxu0 %v853
  %894 = vmatprep.subr.bf16.mxu0 0
  %895 = vmatpush2.bf16.msra.mxu0 %v852
  %896 = vmatprep.subr.bf16.mxu0 0
  %897 = vmatpush2.bf16.msra.mxu0 %v851
  %898 = vmatprep.subr.bf16.mxu0 0
  %899 = vmatpush2.bf16.msra.mxu0 %v850
  %900 = vmatprep.subr.bf16.mxu0 0
  %901 = vmatpush2.bf16.msra.mxu0 %v849
  %902 = vmatprep.subr.bf16.mxu0 0
  %903 = vmatpush2.bf16.msra.mxu0 %v848
  %904 = vmatprep.mubr.bf16.mxu0 %v736
  %905 = vmatmul.mubr.bf16.gmra.mxu0 %v687
  %v906 = vpop.f32.mrf.mxu0
  %v907 = vadd.f32 %v774, %v906
  %v908 = vpop.f32.mrf.mxu0
  %v909 = vpop.f32.mrf.mxu0
  %v910 = vpop.f32.mrf.mxu0
  %911 = vdwg.mxu0
  %912 = vst [vmem:[%s11] sm:$0xff] %v907
  // Predicated region
  $region46: #{sage_forward.1} parent=0 // pred_check
    _
  $region47: #{sage_forward.1} parent=0 // pred_check_branch
    %914 = sbr.rel (0) target = $region49
  $region48: #{sage_forward.1} parent=0 // pred_region
    _
  $region49: #{sage_forward.1} parent=0 // pred_fallthru
    _
  // Predicated region
  $region50: #{sage_forward.1} parent=0 // pred_check
    _
  $region51: #{sage_forward.1} parent=0 // pred_check_branch
    %916 = sbr.rel (0) target = $region53
  $region52: #{sage_forward.1} parent=0 // pred_region
    _
  $region53: #{sage_forward.1} parent=0 // pred_fallthru
    _

</llo_original>
